<compile_context>
chip_gen: v7x
topology: tpu7x:2x2x1
jax: 0.10.0
libtpu: 0.0.40
codegen_flags: <defaults>
</compile_context>

<pallas_src>
import jax
import jax.numpy as jnp
from jax.experimental import pallas as pl
from jax.experimental.pallas import tpu as pltpu


def _round_up(x, m):
    return (x + m - 1) // m * m


def mlp_fuse_kernel(x_ref, w1_ref, b1_ref, w2_ref, b2_ref, o_ref, acc_ref):
    # grid = (M tiles ["parallel"], K tiles ["arbitrary", reduction, last])
    # x_ref:  (TM, TK)  activation tile (native dtype, cast in-kernel)
    # w1_ref: (TK, H)   linear_mlp weight tile ([in, out]); b1_ref: (1, H) f32
    # w2_ref: (H, H)    dense weight ([in, out], VMEM-resident); b2_ref: (1, H) f32
    # acc_ref: (TM, H)  f32 accumulator for the first matmul
    k = pl.program_id(1)

    @pl.when(k == 0)
    def _init():
        acc_ref[...] = jnp.zeros_like(acc_ref)

    # First matmul (linear_mlp), f32 accumulation over the K axis.
    x16 = x_ref[...].astype(w1_ref.dtype)
    acc_ref[...] += jnp.dot(x16, w1_ref[...], preferred_element_type=jnp.float32)

    @pl.when(k == pl.num_programs(1) - 1)
    def _finalize():
        # Bias in f32, single cast, then straight into the second MXU pass
        # (no scratch store/load between the two matmuls).
        h = (acc_ref[...] + b1_ref[...]).astype(w2_ref.dtype)
        # TODO(synk): dropout is identity here (eval / inference); training-mode dropout
        #             would draw pltpu.prng_random_bits in-kernel and mask/scale h.
        out = jnp.dot(h, w2_ref[...], preferred_element_type=jnp.float32) + b2_ref[...]
        o_ref[...] = out.astype(o_ref.dtype)


def mlp_fuse(features, w_mlp, b_mlp, w_dense, b_dense, *, tm=128, tk=512,
             compute_dtype=jnp.bfloat16, out_dtype=None):
    """features: [M, filter_size*hidden]; weights stored [in, out] (PyTorch weight.T).

    Returns [M, hidden] in `out_dtype` (defaults to features.dtype).
    """
    M, K = features.shape
    H = w_mlp.shape[1]
    out_dtype = features.dtype if out_dtype is None else out_dtype

    # Defensive handling of 1-D nn.Linear biases; biases stay f32.
    b1 = jnp.asarray(b_mlp, jnp.float32).reshape(1, H)
    b2 = jnp.asarray(b_dense, jnp.float32).reshape(1, H)
    # In a real model these bf16 weights should be cached outside the per-call path.
    w1 = jnp.asarray(w_mlp).astype(compute_dtype)
    w2 = jnp.asarray(w_dense).astype(compute_dtype)

    # M tiling: pad (copy) only when M is not already a multiple of the tile.
    M_pad = _round_up(M, 8)
    TM = min(tm, M_pad)
    M_pad = _round_up(M_pad, TM)
    if M_pad != M:
        x = jnp.zeros((M_pad, K), features.dtype).at[:M, :].set(features)
    else:
        x = features

    # K tiling: full-extent block (single step) unless K is large and cleanly 128-tileable.
    if K % 128 == 0 and K % tk == 0 and K > tk:
        TK = tk
    else:
        TK = K
    nm, nk = M_pad // TM, K // TK

    cost = pl.CostEstimate(
        flops=2 * M_pad * K * H + 2 * M_pad * H * H,
        transcendentals=0,
        bytes_accessed=(x.size * x.dtype.itemsize
                        + (w1.size + w2.size) * jnp.dtype(compute_dtype).itemsize
                        + (b1.size + b2.size) * 4
                        + M_pad * H * jnp.dtype(out_dtype).itemsize),
    )

    out = pl.pallas_call(
        mlp_fuse_kernel,
        out_shape=jax.ShapeDtypeStruct((M_pad, H), out_dtype),
        grid_spec=pltpu.PrefetchScalarGridSpec(
            num_scalar_prefetch=0,
            grid=(nm, nk),
            in_specs=[
                pl.BlockSpec((TM, TK), lambda i, k: (i, k)),   # streamed activation tile
                pl.BlockSpec((TK, H), lambda i, k: (k, 0)),    # linear_mlp weight tile
                pl.BlockSpec((1, H), lambda i, k: (0, 0)),     # b1 (resident)
                pl.BlockSpec((H, H), lambda i, k: (0, 0)),     # dense weight (resident)
                pl.BlockSpec((1, H), lambda i, k: (0, 0)),     # b2 (resident)
            ],
            out_specs=pl.BlockSpec((TM, H), lambda i, k: (i, 0)),
            scratch_shapes=[pltpu.VMEM((TM, H), jnp.float32)],
        ),
        compiler_params=pltpu.CompilerParams(
            dimension_semantics=("parallel", "arbitrary"),
        ),
        cost_estimate=cost,
    )(x, w1, b1, w2, b2)

    return out[:M, :] if M_pad != M else out


if __name__ == "__main__":
    # config.hidden_size = 32, args.filter_size = 3, batch = 2, seq = 8
    hidden = 32
    filter_size = 3
    batch, seq = 2, 8

    key = jax.random.PRNGKey(0)
    k_x, k_w1, k_b1, k_w2, k_b2 = jax.random.split(key, 5)

    # PyTorch input: features [batch, seq, filter_size*hidden]; flatten leading dims.
    features = jax.random.normal(k_x, (batch, seq, filter_size * hidden), jnp.float32)
    x2d = features.reshape(batch * seq, filter_size * hidden)

    # Deterministic parameter init (stored as [in, out] = PyTorch weight.T; 1-D biases).
    w_mlp = jax.random.normal(k_w1, (filter_size * hidden, hidden), jnp.float32) * 0.02
    b_mlp = jax.random.normal(k_b1, (hidden,), jnp.float32) * 0.02
    w_dense = jax.random.normal(k_w2, (hidden, hidden), jnp.float32) * 0.02
    b_dense = jax.random.normal(k_b2, (hidden,), jnp.float32) * 0.02

    out = mlp_fuse(x2d, w_mlp, b_mlp, w_dense, b_dense)
    out = out.reshape(batch, seq, hidden)
    jax.block_until_ready(out)

    # Pure-JAX f32 reference; tolerance relaxed for the bf16 MXU path (f32 accumulation,
    # f32 biases; single bf16 downcast of the intermediate activation).
    ref = (x2d @ w_mlp + b_mlp[None, :]) @ w_dense + b_dense[None, :]
    ref = ref.reshape(batch, seq, hidden)
    assert jnp.allclose(out, ref, atol=1e-2, rtol=1e-2), "mismatch vs reference"

    print("KERNEL_OK")
</pallas_src>

<mosaic_0001>
module attributes {stable_mosaic.version = 11 : i64} {
  func.func @mlp_fuse_kernel(%arg0: i32, %arg1: i32, %arg2: memref<16x96xf32, #tpu.memory_space<vmem>>, %arg3: memref<96x32xbf16, #tpu.memory_space<vmem>>, %arg4: memref<1x32xf32, #tpu.memory_space<vmem>>, %arg5: memref<32x32xbf16, #tpu.memory_space<vmem>>, %arg6: memref<1x32xf32, #tpu.memory_space<vmem>>, %arg7: memref<16x32xf32, #tpu.memory_space<vmem>>, %arg8: memref<16x32xf32, #tpu.memory_space<vmem>>) attributes {dimension_semantics = [#tpu.dimension_semantics<parallel>, #tpu.dimension_semantics<arbitrary>], iteration_bounds = array<i64: 1, 1>, scalar_prefetch = 0 : i64, scratch_operands = 1 : i64, tpu.core_type = #tpu.core_type<tc>, window_params = [{transform_indices = @transform_0, window_bounds = array<i64: 16, 96>}, {transform_indices = @transform_1, window_bounds = array<i64: 96, 32>}, {pipeline_mode = #tpu.pipeline_mode<synchronous>, transform_indices = @transform_2, window_bounds = array<i64: 1, 32>}, {pipeline_mode = #tpu.pipeline_mode<synchronous>, transform_indices = @transform_3, window_bounds = array<i64: 32, 32>}, {pipeline_mode = #tpu.pipeline_mode<synchronous>, transform_indices = @transform_4, window_bounds = array<i64: 1, 32>}, {transform_indices = @transform_5, window_bounds = array<i64: 16, 32>}]} {
    %c0_i32 = arith.constant 0 : i32
    %0 = arith.cmpi eq, %arg1, %c0_i32 : i32
    %1 = arith.extui %0 : i1 to i32
    %c0_i32_0 = arith.constant 0 : i32
    %2 = arith.cmpi ne, %1, %c0_i32_0 : i32
    scf.if %2 {
      %cst_10 = arith.constant 0.000000e+00 : f32
      %13 = vector.broadcast %cst_10 : f32 to vector<16x32xf32>
      %c0_11 = arith.constant 0 : index
      %c0_12 = arith.constant 0 : index
      %14 = vector.load %arg8[%c0_11, %c0_12] : memref<16x32xf32, #tpu.memory_space<vmem>>, vector<16x32xf32>
      tpu.vector_store %arg8[%c0_11, %c0_12], %13 {strides = array<i32>} : memref<16x32xf32, #tpu.memory_space<vmem>>, vector<16x32xf32>,
    } else {
    }
    %c0 = arith.constant 0 : index
    %c0_1 = arith.constant 0 : index
    %3 = vector.load %arg2[%c0, %c0_1] : memref<16x96xf32, #tpu.memory_space<vmem>>, vector<16x96xf32>
    %4 = arith.truncf %3 : vector<16x96xf32> to vector<16x96xbf16>
    %c0_2 = arith.constant 0 : index
    %c0_3 = arith.constant 0 : index
    %5 = vector.load %arg8[%c0_2, %c0_3] : memref<16x32xf32, #tpu.memory_space<vmem>>, vector<16x32xf32>
    %c0_4 = arith.constant 0 : index
    %c0_5 = arith.constant 0 : index
    %6 = vector.load %arg3[%c0_4, %c0_5] : memref<96x32xbf16, #tpu.memory_space<vmem>>, vector<96x32xbf16>
    %cst = arith.constant dense<0.000000e+00> : vector<16x32xf32>
    %7 = tpu.matmul %4, %6, %cst {dimension_numbers = #tpu.dot_dimension_numbers<[1], [0], [0], [1], [0, 0, 1, 1], [], []>} : vector<16x96xbf16>, vector<96x32xbf16>, vector<16x32xf32> -> vector<16x32xf32>
    %8 = arith.addf %5, %7 : vector<16x32xf32>
    %c0_6 = arith.constant 0 : index
    %c0_7 = arith.constant 0 : index
    %9 = vector.load %arg8[%c0_6, %c0_7] : memref<16x32xf32, #tpu.memory_space<vmem>>, vector<16x32xf32>
    tpu.vector_store %arg8[%c0_6, %c0_7], %8 {strides = array<i32>} : memref<16x32xf32, #tpu.memory_space<vmem>>, vector<16x32xf32>,
    %c0_i32_8 = arith.constant 0 : i32
    %10 = arith.cmpi eq, %arg1, %c0_i32_8 : i32
    %11 = arith.extui %10 : i1 to i32
    %c0_i32_9 = arith.constant 0 : i32
    %12 = arith.cmpi ne, %11, %c0_i32_9 : i32
    scf.if %12 {
      %c0_10 = arith.constant 0 : index
      %c0_11 = arith.constant 0 : index
      %13 = vector.load %arg8[%c0_10, %c0_11] : memref<16x32xf32, #tpu.memory_space<vmem>>, vector<16x32xf32>
      %c0_12 = arith.constant 0 : index
      %c0_13 = arith.constant 0 : index
      %14 = vector.load %arg4[%c0_12, %c0_13] : memref<1x32xf32, #tpu.memory_space<vmem>>, vector<1x32xf32>
      %15 = vector.broadcast %14 : vector<1x32xf32> to vector<16x32xf32>
      %16 = arith.addf %13, %15 : vector<16x32xf32>
      %17 = arith.truncf %16 : vector<16x32xf32> to vector<16x32xbf16>
      %c0_14 = arith.constant 0 : index
      %c0_15 = arith.constant 0 : index
      %18 = vector.load %arg5[%c0_14, %c0_15] : memref<32x32xbf16, #tpu.memory_space<vmem>>, vector<32x32xbf16>
      %cst_16 = arith.constant dense<0.000000e+00> : vector<16x32xf32>
      %19 = tpu.matmul %17, %18, %cst_16 {dimension_numbers = #tpu.dot_dimension_numbers<[1], [0], [0], [1], [0, 0, 1, 1], [], []>} : vector<16x32xbf16>, vector<32x32xbf16>, vector<16x32xf32> -> vector<16x32xf32>
      %c0_17 = arith.constant 0 : index
      %c0_18 = arith.constant 0 : index
      %20 = vector.load %arg6[%c0_17, %c0_18] : memref<1x32xf32, #tpu.memory_space<vmem>>, vector<1x32xf32>
      %21 = vector.broadcast %20 : vector<1x32xf32> to vector<16x32xf32>
      %22 = arith.addf %19, %21 : vector<16x32xf32>
      %c0_19 = arith.constant 0 : index
      %c0_20 = arith.constant 0 : index
      %23 = vector.load %arg7[%c0_19, %c0_20] : memref<16x32xf32, #tpu.memory_space<vmem>>, vector<16x32xf32>
      tpu.vector_store %arg7[%c0_19, %c0_20], %22 {strides = array<i32>} : memref<16x32xf32, #tpu.memory_space<vmem>>, vector<16x32xf32>,
    } else {
    }
    return
  }
  func.func @transform_0(%arg0: i32, %arg1: i32) -> (i32, i32) {
    %c0_i32 = arith.constant 0 : i32
    return %arg0, %arg1 : i32, i32
  }
  func.func @transform_1(%arg0: i32, %arg1: i32) -> (i32, i32) {
    %c0_i32 = arith.constant 0 : i32
    %c0_i32_0 = arith.constant 0 : i32
    return %arg1, %c0_i32 : i32, i32
  }
  func.func @transform_2(%arg0: i32, %arg1: i32) -> (i32, i32) {
    %c0_i32 = arith.constant 0 : i32
    %c0_i32_0 = arith.constant 0 : i32
    %c0_i32_1 = arith.constant 0 : i32
    return %c0_i32, %c0_i32_0 : i32, i32
  }
  func.func @transform_3(%arg0: i32, %arg1: i32) -> (i32, i32) {
    %c0_i32 = arith.constant 0 : i32
    %c0_i32_0 = arith.constant 0 : i32
    %c0_i32_1 = arith.constant 0 : i32
    return %c0_i32, %c0_i32_0 : i32, i32
  }
  func.func @transform_4(%arg0: i32, %arg1: i32) -> (i32, i32) {
    %c0_i32 = arith.constant 0 : i32
    %c0_i32_0 = arith.constant 0 : i32
    %c0_i32_1 = arith.constant 0 : i32
    return %c0_i32, %c0_i32_0 : i32, i32
  }
  func.func @transform_5(%arg0: i32, %arg1: i32) -> (i32, i32) {
    %c0_i32 = arith.constant 0 : i32
    %c0_i32_0 = arith.constant 0 : i32
    return %arg0, %c0_i32 : i32, i32
  }
}

</mosaic_0001>

<llo_original>
// kernel: tpu_custom_call.1
$region0: #{tpu_custom_call.1}
  #allocation0 [shape = 'u32[]', space=smem, size = 0x4, offset = 0x4, fixed_abs, tag = 'smem constant byte address 0x4 - core index']
  #allocation1 [shape = 'u32[144,128]{1,0:T(1,128)}', space=vmem, size = 0x12000, scoped, tag = 'internal scratch']
  #allocation2 [shape = 'f32[16,32]{1,0:T(8,128)}', space=vmem, size = 0x2000, scoped, tag = 'scratch operand']
  %s0 = inlined_call_operand.vmem [shape: f32[16,96], index: 0, kind: input, shape index: {}]
  %s1 = inlined_call_operand.vmem [shape: bf16[96,32], index: 1, kind: input, shape index: {}]
  %s2 = inlined_call_operand.vmem [shape: f32[1,32], index: 2, kind: input, shape index: {}]
  %s3 = inlined_call_operand.vmem [shape: bf16[32,32], index: 3, kind: input, shape index: {}]
  %s4 = inlined_call_operand.vmem [shape: f32[1,32], index: 4, kind: input, shape index: {}]
  %s5 = inlined_call_operand.hbm [shape: f32[16,32], index: 5, kind: output, shape index: {}]
  %s6 = sld [smem:[#allocation0]]
  $region38: #{tpu_custom_call.1} parent=0
    _
  %s8 = ssub.s32 1, %s6
  %s9 = scalar_select 0, %s8, %s6
  $region1: #{tpu_custom_call.1} parent=0
    #allocation3 [shape = 'u8[8192]{0}', space=vmem, size = 0x2000, scoped, tag = 'output window, operand 0, single buffered']
    #allocation4 [shape = 's32[1]{0}', space=sflag, size = 0x4, scoped, tag = 'scoped memory for tpu_custom_call.1']
    %10 = vsyncpa [#allocation4], 0
    // Predicated region
    $region2: #{tpu_custom_call.1} parent=1 // pred_check
      _
    $region3: #{tpu_custom_call.1} parent=1 // pred_check_branch
      %12 = sbr.rel (0) target = $region5
    $region4: #{tpu_custom_call.1} parent=1 // pred_region
      _
    $region5: #{tpu_custom_call.1} parent=1 // pred_fallthru
      _
    // Predicated region
    $region6: #{tpu_custom_call.1} parent=1 // pred_check
      _
    $region7: #{tpu_custom_call.1} parent=1 // pred_check_branch
      %14 = sbr.rel (0) target = $region9
    $region8: #{tpu_custom_call.1} parent=1 // pred_region
      _
    $region9: #{tpu_custom_call.1} parent=1 // pred_fallthru
      _
    // Predicated region
    $region10: #{tpu_custom_call.1} parent=1 // pred_check
      _
    $region11: #{tpu_custom_call.1} parent=1 // pred_check_branch
      %16 = sbr.rel (0) target = $region13
    $region12: #{tpu_custom_call.1} parent=1 // pred_region
      _
    $region13: #{tpu_custom_call.1} parent=1 // pred_fallthru
      _
    // Predicated region
    $region14: #{tpu_custom_call.1} parent=1 // pred_check
      _
    $region15: #{tpu_custom_call.1} parent=1 // pred_check_branch
      %18 = sbr.rel (0) target = $region17
    $region16: #{tpu_custom_call.1} parent=1 // pred_region
      _
    $region17: #{tpu_custom_call.1} parent=1 // pred_fallthru
      _
    // Predicated region
    $region18: #{tpu_custom_call.1} parent=1 // pred_check
      _
    $region19: #{tpu_custom_call.1} parent=1 // pred_check_branch
      %20 = sbr.rel (0) target = $region21
    $region20: #{tpu_custom_call.1} parent=1 // pred_region
      _
    $region21: #{tpu_custom_call.1} parent=1 // pred_fallthru
      _
    %p22 = scmp.eq.s32.totalorder 0, 0
    // Predicated region
    $region22: #{tpu_custom_call.1} parent=1 // pred_check
      %p23 = pneg %p22
    $region23: #{tpu_custom_call.1} parent=1 // pred_check_branch
      %25 = sbr.rel (%p23) target = $region25
    $region24: #{tpu_custom_call.1} parent=1 // pred_region
      %vm26 = vcmask 261120
      %27 = vst.msk [vmem:[#allocation2] sm:$0xff] %vm26, 0.0
      %28 = vst.msk [vmem:[#allocation2 + $0x8] sm:$0xff] %vm26, 0.0
    $region25: #{tpu_custom_call.1} parent=1 // pred_fallthru
      _
    %v29 = vld [vmem:[%s0] sm:$0xff]
    %v30 = vld [vmem:[%s0 + $0x8] sm:$0xff]
    %v31 = vpack.c.bf16 %v30, %v29
    %v32 = vld [vmem:[#allocation2] sm:$0xff]
    %v33 = vld [vmem:[#allocation2 + $0x8] sm:$0xff]
    %v34 = vld [vmem:[%s1] sm:$0xf]
    %v35 = vld [vmem:[%s1 + $0x4] sm:$0xf]
    %v36 = vld [vmem:[%s1 + $0x8] sm:$0xf]
    %v37 = vld [vmem:[%s1 + $0xc] sm:$0xf]
    %v38 = vld [vmem:[%s1 + $0x10] sm:$0xf]
    %v39 = vld [vmem:[%s1 + $0x14] sm:$0xf]
    %v40 = vld [vmem:[%s1 + $0x18] sm:$0xf]
    %v41 = vld [vmem:[%s1 + $0x1c] sm:$0xf]
    %v42 = vld [vmem:[%s1 + $0x20] sm:$0xf]
    %v43 = vld [vmem:[%s1 + $0x24] sm:$0xf]
    %v44 = vld [vmem:[%s1 + $0x28] sm:$0xf]
    %v45 = vld [vmem:[%s1 + $0x2c] sm:$0xf]
    %v58 = vunpack.c.l.b16 %v34
    %v59 = vunpack.c.l.b16 %v35
    %v60 = vunpack.c.l.b16 %v36
    %v61 = vunpack.c.l.b16 %v37
    %v62 = vunpack.c.l.b16 %v38
    %v63 = vunpack.c.l.b16 %v39
    %v64 = vunpack.c.l.b16 %v40
    %v65 = vunpack.c.l.b16 %v41
    %v66 = vunpack.c.l.b16 %v42
    %v67 = vunpack.c.l.b16 %v43
    %v68 = vunpack.c.l.b16 %v44
    %v69 = vunpack.c.l.b16 %v45
    %v70 = vpack.c.b16 %v59, %v58
    %v71 = vpack.c.b16 %v61, %v60
    %v72 = vpack.c.b16 %v63, %v62
    %v73 = vpack.c.b16 %v65, %v64
    %v74 = vpack.c.b16 %v67, %v66
    %v75 = vpack.c.b16 %v69, %v68
    %vm82 = vcmask 785408
    %v84 = vsel %vm82, %v31, 0
    %86 = vmatprep.subr.bf16.mxu0 0
    %87 = vmatpush1.bf16.msra.mxu0 %v70
    %88 = vmatprep.subr.bf16.mxu0 0
    %89 = vmatpush1.bf16.msra.mxu0 %v71
    %90 = vmatprep.subr.bf16.mxu0 0
    %91 = vmatpush1.bf16.msra.mxu0 %v72
    %92 = vmatprep.subr.bf16.mxu0 0
    %93 = vmatpush1.bf16.msra.mxu0 %v73
    %94 = vmatprep.subr.bf16.mxu0 0
    %95 = vmatpush1.bf16.msra.mxu0 %v74
    %96 = vmatprep.subr.bf16.mxu0 0
    %97 = vmatpush1.bf16.msra.mxu0 %v75
    %98 = vmatprep.subr.bf16.mxu0 0
    %99 = vmatpush1.bf16.msra.mxu0 0
    %100 = vmatprep.subr.bf16.mxu0 0
    %101 = vmatpush1.bf16.msra.mxu0 0
    %102 = vmatprep.subr.bf16.mxu0 0
    %103 = vmatpush1.bf16.msra.mxu0 0
    %104 = vmatprep.subr.bf16.mxu0 0
    %105 = vmatpush1.bf16.msra.mxu0 0
    %106 = vmatprep.subr.bf16.mxu0 0
    %107 = vmatpush1.bf16.msra.mxu0 0
    %108 = vmatprep.subr.bf16.mxu0 0
    %109 = vmatpush1.bf16.msra.mxu0 0
    %110 = vmatprep.subr.bf16.mxu0 0
    %111 = vmatpush1.bf16.msra.mxu0 0
    %112 = vmatprep.subr.bf16.mxu0 0
    %113 = vmatpush1.bf16.msra.mxu0 0
    %114 = vmatprep.subr.bf16.mxu0 0
    %115 = vmatpush1.bf16.msra.mxu0 0
    %116 = vmatprep.subr.bf16.mxu0 0
    %117 = vmatpush1.bf16.msra.mxu0 0
    %118 = vmatprep.mubr.bf16.mxu0 0
    %119 = vmatmul.mubr.bf16.gmra.mrb[0].mxu0 %v84
    %v120 = vpop.f32.mrb[0].mxu0
    %v121 = vadd.f32 0.0, %v120
    %v122 = vpop.f32.mrb[0].mxu0
    %v123 = vpop.f32.mrb[0].mxu0
    %v124 = vadd.f32 0.0, %v123
    %v125 = vpop.f32.mrb[0].mxu0
    %126 = vdwg.mxu0
    %v127 = vadd.f32 %v32, %v121
    %v128 = vadd.f32 %v33, %v124
    %vm129 = vcmask 261120
    %130 = vst.msk [vmem:[#allocation2] sm:$0xff] %vm129, %v127
    %131 = vst.msk [vmem:[#allocation2 + $0x8] sm:$0xff] %vm129, %v128
    // Predicated region
    $region26: #{tpu_custom_call.1} parent=1 // pred_check
      %p132 = pneg %p22
    $region27: #{tpu_custom_call.1} parent=1 // pred_check_branch
      %134 = sbr.rel (%p132) target = $region29
    $region28: #{tpu_custom_call.1} parent=1 // pred_region
      %v135 = vld [vmem:[#allocation2] sm:$0xff]
      %v136 = vld [vmem:[#allocation2 + $0x8] sm:$0xff]
      %v137 = vld [vmem:[%s2] sm:$0x1]
      %v139 = vlaneseq
      %v140 = vshrl.u32 %v139, 7
      %v141 = vsub.s32 0, %v140
      %v142 = vrot.slane %v137, %v141
      %v144 = vadd.f32 %v135, %v142
      %v145 = vadd.f32 %v136, %v142
      %v146 = vpack.c.bf16 %v145, %v144
      %v147 = vld [vmem:[%s3] sm:$0xf]
      %v148 = vld [vmem:[%s3 + $0x4] sm:$0xf]
      %v149 = vld [vmem:[%s3 + $0x8] sm:$0xf]
      %v150 = vld [vmem:[%s3 + $0xc] sm:$0xf]
      %v151 = vld [vmem:[%s4] sm:$0x1]
      %v153 = vlaneseq
      %v154 = vshrl.u32 %v153, 7
      %v155 = vsub.s32 0, %v154
      %v156 = vrot.slane %v151, %v155
      %v162 = vunpack.c.l.b16 %v147
      %v163 = vunpack.c.l.b16 %v148
      %v164 = vunpack.c.l.b16 %v149
      %v165 = vunpack.c.l.b16 %v150
      %v166 = vpack.c.b16 %v163, %v162
      %v167 = vpack.c.b16 %v165, %v164
      %v171 = vsel %vm129, %v146, 0
      %173 = vmatprep.subr.bf16.mxu0 0
      %174 = vmatpush1.bf16.msra.mxu0 %v166
      %175 = vmatprep.subr.bf16.mxu0 0
      %176 = vmatpush1.bf16.msra.mxu0 %v167
      %177 = vmatprep.subr.bf16.mxu0 0
      %178 = vmatpush1.bf16.msra.mxu0 0
      %179 = vmatprep.subr.bf16.mxu0 0
      %180 = vmatpush1.bf16.msra.mxu0 0
      %181 = vmatprep.subr.bf16.mxu0 0
      %182 = vmatpush1.bf16.msra.mxu0 0
      %183 = vmatprep.subr.bf16.mxu0 0
      %184 = vmatpush1.bf16.msra.mxu0 0
      %185 = vmatprep.subr.bf16.mxu0 0
      %186 = vmatpush1.bf16.msra.mxu0 0
      %187 = vmatprep.subr.bf16.mxu0 0
      %188 = vmatpush1.bf16.msra.mxu0 0
      %189 = vmatprep.subr.bf16.mxu0 0
      %190 = vmatpush1.bf16.msra.mxu0 0
      %191 = vmatprep.subr.bf16.mxu0 0
      %192 = vmatpush1.bf16.msra.mxu0 0
      %193 = vmatprep.subr.bf16.mxu0 0
      %194 = vmatpush1.bf16.msra.mxu0 0
      %195 = vmatprep.subr.bf16.mxu0 0
      %196 = vmatpush1.bf16.msra.mxu0 0
      %197 = vmatprep.subr.bf16.mxu0 0
      %198 = vmatpush1.bf16.msra.mxu0 0
      %199 = vmatprep.subr.bf16.mxu0 0
      %200 = vmatpush1.bf16.msra.mxu0 0
      %201 = vmatprep.subr.bf16.mxu0 0
      %202 = vmatpush1.bf16.msra.mxu0 0
      %203 = vmatprep.subr.bf16.mxu0 0
      %204 = vmatpush1.bf16.msra.mxu0 0
      %205 = vmatprep.mubr.bf16.mxu0 0
      %206 = vmatmul.mubr.bf16.gmra.mrb[0].mxu0 %v171
      %v207 = vpop.f32.mrb[0].mxu0
      %v208 = vadd.f32 %v156, %v207
      %v209 = vpop.f32.mrb[0].mxu0
      %v210 = vpop.f32.mrb[0].mxu0
      %v211 = vadd.f32 %v156, %v210
      %v212 = vpop.f32.mrb[0].mxu0
      %213 = vdwg.mxu0
      %214 = vst.msk [vmem:[#allocation3] sm:$0xff] %vm129, %v208
      %215 = vst.msk [vmem:[#allocation3 + $0x8] sm:$0xff] %vm129, %v211
    $region29: #{tpu_custom_call.1} parent=1 // pred_fallthru
      _
    // Predicated region
    $region30: #{tpu_custom_call.1} parent=1 // pred_check
      _
    $region31: #{tpu_custom_call.1} parent=1 // pred_check_branch
      %217 = sbr.rel (0) target = $region33
    $region32: #{tpu_custom_call.1} parent=1 // pred_region
      %s219 = ssub.s32 256, 256
      %220 = vsyncadd [#allocation4], %s219
      %s221 = sshll.u32 [#allocation3], 4
      %s222 = int_to_ptr.vmem [resolvable:$true] %s221
      %227 = dma.vmem_to_hbm [thread:$0]  %s222, 256, %s5, [#allocation4], 128, 128, 8
    $region33: #{tpu_custom_call.1} parent=1 // pred_fallthru
      _
    // Predicated region
    $region34: #{tpu_custom_call.1} parent=1 // pred_check
      _
    $region35: #{tpu_custom_call.1} parent=1 // pred_check_branch
      %229 = sbr.rel (0) target = $region37
    $region36: #{tpu_custom_call.1} parent=1 // pred_region
      %230 = dma.done [#allocation4], 256
    $region37: #{tpu_custom_call.1} parent=1 // pred_fallthru
      _
    %231 = vsyncpa [#allocation4], 1

</llo_original>
